<compile_context>
chip_gen: v7x
topology: tpu7x:2x2x1
jax: 0.10.0
libtpu: 0.0.40
codegen_flags: <defaults>
</compile_context>

<pallas_src>
import functools

import numpy as np
import jax
import jax.numpy as jnp
from jax import lax
from jax.experimental import pallas as pl
from jax.experimental.pallas import tpu as pltpu

KSIZE = 3                               # fixed 3x3, stride 1, pad 1
_LANE = 128
_VMEM_TILE_BUDGET = 40 * 1024 * 1024    # working-set budget (safe on v7x 64 MiB)
_VMEM_LIMIT = 48 * 1024 * 1024          # scoped VMEM limit handed to Mosaic


def _round_up(x, m):
    return ((x + m - 1) // m) * m


def _conv3x3_sigmoid_kernel(x_ref, w_ref, b_ref, m_ref, o_ref, *, W, TRW):
    # x_ref: (Cin_p, SPt)       bf16  TR output rows + 1-row halo, flattened
    #                                 spatial, left pad of 1, lane-padded.
    # w_ref: (3, Cout, 3*Cin_p) bf16  per-dw weight slabs (dh-major, ch-minor)
    # b_ref: (Cout, 1)          f32   bias
    # m_ref: (2, TRW)           bf16  row0: 0 where out-col==0   (dw=0 taps)
    #                                 row1: 0 where out-col==W-1 (dw=2 taps)
    # o_ref: (Cout, TRW)              lane-dense output tile
    x = x_ref[...]
    masks = m_ref[...]

    acc = None
    for dw in range(KSIZE):
        # Patch group for this dw: rows = dh-major blocks of Cin_p channels.
        taps = [x[:, dh * W + dw: dh * W + dw + TRW] for dh in range(KSIZE)]
        patch = jnp.concatenate(taps, axis=0)               # (3*Cin_p, TRW)
        # Horizontal "same" padding: the flat layout wraps row edges, so zero
        # the wrapped columns.  Masks are indexed by output lane position and
        # therefore independent of the input pad offset.
        if dw == 0:
            patch = patch * masks[0:1, :]
        elif dw == 2:
            patch = patch * masks[1:2, :]
        part = jnp.dot(w_ref[dw], patch, preferred_element_type=jnp.float32)
        acc = part if acc is None else acc + part           # (Cout, TRW) f32

    acc = acc + b_ref[...]                                   # lane-broadcast bias
    # sigmoid(x) == 0.5 * tanh(0.5 * x) + 0.5  -> one EUP transcendental.
    o_ref[...] = (0.5 * jnp.tanh(0.5 * acc) + 0.5).astype(o_ref.dtype)


def _choose_row_tile(H, W, Cin_p, Cout):
    """Largest row-block TR (divisor of H) whose working set fits the VMEM
    budget, preferring TR*W % 128 == 0 so output stores are unmasked."""
    def vmem_bytes(tr):
        trw = tr * W
        spt = _round_up((tr + 2) * W + 2, _LANE)
        x_b = Cin_p * spt * 2              # bf16 input slab (double-buffered)
        out_b = Cout * trw * 4             # f32 output tile (double-buffered)
        w_b = 3 * Cout * 3 * Cin_p * 2
        patch_b = 3 * Cin_p * trw * 2      # per-dw patch transient
        acc_b = Cout * trw * 4
        return (2 * x_b + 2 * out_b + 2 * w_b + 3 * patch_b + 2 * acc_b
                + 2 * trw * 2)

    divisors = [d for d in range(1, H + 1) if H % d == 0]
    fits = [d for d in divisors if vmem_bytes(d) <= _VMEM_TILE_BUDGET] or [1]
    aligned = [d for d in fits if (d * W) % _LANE == 0]
    return max(aligned) if aligned else max(fits)


@jax.jit
def basic_block_sig(x_nchw, weight, bias):
    """Conv2d(Cin, Cout, 3, stride=1, pad=1) + Sigmoid.  NCHW in / NCHW out."""
    N, Cin, H, W = x_nchw.shape
    Cout = weight.shape[0]
    HW = H * W
    Cin_p = _round_up(max(Cin, 16), 16)          # bf16 packs 16 sublanes/vreg

    TR = _choose_row_tile(H, W, Cin_p, Cout)     # output rows per grid step
    n_ht = H // TR
    TRW = TR * W
    SPt = _round_up((TR + 2) * W + 2, _LANE)     # flat slab length, lane-aligned

    # ---- wrapper-side layout plumbing (pads, slices, free reshapes) --------
    xb = x_nchw.astype(jnp.bfloat16)
    xr = jnp.pad(xb, ((0, 0), (0, Cin_p - Cin), (1, 1), (0, 0)))  # ch pad + row halo
    slabs = []
    for t in range(n_ht):                        # per-tile slabs, halo baked in
        sl = xr[:, :, t * TR: t * TR + TR + 2, :]                 # (N,Cin_p,TR+2,W)
        slabs.append(sl.reshape(N, Cin_p, (TR + 2) * W))
    xt = jnp.stack(slabs, axis=1)                                 # (N,n_ht,Cin_p,(TR+2)W)
    xt = jnp.pad(xt, ((0, 0), (0, 0), (0, 0), (1, SPt - (TR + 2) * W - 1)))

    # Weights: (Cout, Cin, 3, 3) -> (dw, Cout, dh-major x channel-minor), bf16.
    wp = jnp.pad(weight, ((0, 0), (0, Cin_p - Cin), (0, 0), (0, 0)))
    w3 = jnp.transpose(wp, (3, 0, 2, 1)).reshape(KSIZE, Cout, KSIZE * Cin_p)
    w3 = w3.astype(jnp.bfloat16)
    b2 = bias.reshape(Cout, 1).astype(jnp.float32)

    # Edge-column masks indexed by output lane position within a tile.
    col = jnp.arange(TRW, dtype=jnp.int32) % W
    masks = jnp.stack([(col != 0), (col != W - 1)]).astype(jnp.bfloat16)

    kernel = functools.partial(_conv3x3_sigmoid_kernel, W=W, TRW=TRW)

    cost = pl.CostEstimate(
        flops=2 * N * HW * Cin * Cout * KSIZE * KSIZE,
        transcendentals=N * Cout * HW,
        bytes_accessed=(2 * xt.size + 2 * w3.size + 4 * b2.size
                        + 2 * masks.size + 4 * N * Cout * HW),
    )

    out_flat = pl.pallas_call(
        kernel,
        out_shape=jax.ShapeDtypeStruct((N, Cout, HW), x_nchw.dtype),
        grid_spec=pltpu.PrefetchScalarGridSpec(
            num_scalar_prefetch=0,
            grid=(N, n_ht),
            in_specs=[
                pl.BlockSpec((None, None, Cin_p, SPt), lambda n, t: (n, t, 0, 0)),
                pl.BlockSpec((KSIZE, Cout, KSIZE * Cin_p), lambda n, t: (0, 0, 0)),
                pl.BlockSpec((Cout, 1), lambda n, t: (0, 0)),
                pl.BlockSpec((2, TRW), lambda n, t: (0, 0)),
            ],
            out_specs=pl.BlockSpec((None, Cout, TRW), lambda n, t: (n, 0, t)),
        ),
        compiler_params=pltpu.CompilerParams(
            dimension_semantics=("parallel", "parallel"),
            vmem_limit_bytes=_VMEM_LIMIT,
        ),
        cost_estimate=cost,
    )(xt, w3, b2, masks)

    return out_flat.reshape(N, Cout, H, W)       # free reshape back to NCHW


def _reference(x_nchw, weight, bias):
    out = jax.lax.conv_general_dilated(
        x_nchw, weight, window_strides=(1, 1), padding=((1, 1), (1, 1)),
        dimension_numbers=("NCHW", "OIHW", "NCHW"))
    return jax.nn.sigmoid(out + bias[None, :, None, None])


if __name__ == "__main__":
    # Deterministic synthetic params / inputs (no checkpoint loading).
    N, Cin, Cout, H, W = 2, 4, 8, 16, 16
    key = jax.random.PRNGKey(0)
    kx, kw, kb = jax.random.split(key, 3)

    x = jax.random.normal(kx, (N, Cin, H, W), dtype=jnp.float32)
    fan_in = Cin * KSIZE * KSIZE
    weight = jax.random.normal(kw, (Cout, Cin, KSIZE, KSIZE),
                               dtype=jnp.float32) * (1.0 / np.sqrt(fan_in))
    bias = jax.random.normal(kb, (Cout,), dtype=jnp.float32) * 0.1

    out = jax.block_until_ready(basic_block_sig(x, weight, bias))

    # Reference evaluated on the bf16-rounded activations/weights the kernel
    # consumes (kernel uses bf16 inputs with f32 MXU accumulation by design).
    x_r = x.astype(jnp.bfloat16).astype(jnp.float32)
    w_r = weight.astype(jnp.bfloat16).astype(jnp.float32)
    ref = jax.block_until_ready(_reference(x_r, w_r, bias))

    if np.allclose(np.asarray(out), np.asarray(ref), rtol=2e-3, atol=2e-3):
        print("KERNEL_OK")
    else:
        print("MISMATCH: max abs err =",
              float(np.max(np.abs(np.asarray(out) - np.asarray(ref)))))
</pallas_src>

<mosaic_0001>
module attributes {stable_mosaic.version = 11 : i64} {
  func.func @_conv3x3_sigmoid_kernel(%arg0: i32, %arg1: i32, %arg2: memref<1x1x16x384xbf16, #tpu.memory_space<vmem>>, %arg3: memref<3x8x48xbf16, #tpu.memory_space<vmem>>, %arg4: memref<8x1xf32, #tpu.memory_space<vmem>>, %arg5: memref<2x256xbf16, #tpu.memory_space<vmem>>, %arg6: memref<1x8x256xf32, #tpu.memory_space<vmem>>) attributes {dimension_semantics = [#tpu.dimension_semantics<parallel>, #tpu.dimension_semantics<parallel>], iteration_bounds = array<i64: 2, 1>, scalar_prefetch = 0 : i64, scratch_operands = 0 : i64, tpu.core_type = #tpu.core_type<tc>, window_params = [{transform_indices = @transform_0, window_bounds = array<i64: 1, 1, 16, 384>}, {pipeline_mode = #tpu.pipeline_mode<synchronous>, transform_indices = @transform_1, window_bounds = array<i64: 3, 8, 48>}, {pipeline_mode = #tpu.pipeline_mode<synchronous>, transform_indices = @transform_2, window_bounds = array<i64: 8, 1>}, {pipeline_mode = #tpu.pipeline_mode<synchronous>, transform_indices = @transform_3, window_bounds = array<i64: 2, 256>}, {transform_indices = @transform_4, window_bounds = array<i64: 1, 8, 256>}]} {
    %c0 = arith.constant 0 : index
    %c0_0 = arith.constant 0 : index
    %c0_1 = arith.constant 0 : index
    %c0_2 = arith.constant 0 : index
    %0 = vector.load %arg2[%c0, %c0_0, %c0_1, %c0_2] : memref<1x1x16x384xbf16, #tpu.memory_space<vmem>>, vector<1x1x16x384xbf16>
    %1 = vector.shape_cast %0 : vector<1x1x16x384xbf16> to vector<16x384xbf16>
    %c0_3 = arith.constant 0 : index
    %c0_4 = arith.constant 0 : index
    %2 = vector.load %arg5[%c0_3, %c0_4] : memref<2x256xbf16, #tpu.memory_space<vmem>>, vector<2x256xbf16>
    %3 = vector.extract_strided_slice %1 {offsets = [0, 0], sizes = [16, 256], strides = [1, 1]} : vector<16x384xbf16> to vector<16x256xbf16>
    %4 = vector.extract_strided_slice %1 {offsets = [0, 16], sizes = [16, 256], strides = [1, 1]} : vector<16x384xbf16> to vector<16x256xbf16>
    %5 = vector.extract_strided_slice %1 {offsets = [0, 32], sizes = [16, 256], strides = [1, 1]} : vector<16x384xbf16> to vector<16x256xbf16>
    %6 = tpu.concatenate %3, %4, %5 in 0 : vector<16x256xbf16>, vector<16x256xbf16>, vector<16x256xbf16> -> vector<48x256xbf16>
    %7 = vector.extract_strided_slice %2 {offsets = [0, 0], sizes = [1, 256], strides = [1, 1]} : vector<2x256xbf16> to vector<1x256xbf16>
    %8 = vector.broadcast %7 : vector<1x256xbf16> to vector<48x256xbf16>
    %9 = arith.mulf %6, %8 : vector<48x256xbf16>
    %c0_5 = arith.constant 0 : index
    %c0_6 = arith.constant 0 : index
    %c0_7 = arith.constant 0 : index
    %10 = vector.load %arg3[%c0_5, %c0_6, %c0_7] : memref<3x8x48xbf16, #tpu.memory_space<vmem>>, vector<1x8x48xbf16>
    %11 = vector.shape_cast %10 : vector<1x8x48xbf16> to vector<8x48xbf16>
    %cst = arith.constant dense<0.000000e+00> : vector<8x256xf32>
    %12 = tpu.matmul %11, %9, %cst {dimension_numbers = #tpu.dot_dimension_numbers<[1], [0], [0], [1], [0, 0, 1, 1], [], []>} : vector<8x48xbf16>, vector<48x256xbf16>, vector<8x256xf32> -> vector<8x256xf32>
    %13 = vector.extract_strided_slice %1 {offsets = [0, 1], sizes = [16, 256], strides = [1, 1]} : vector<16x384xbf16> to vector<16x256xbf16>
    %14 = vector.extract_strided_slice %1 {offsets = [0, 17], sizes = [16, 256], strides = [1, 1]} : vector<16x384xbf16> to vector<16x256xbf16>
    %15 = vector.extract_strided_slice %1 {offsets = [0, 33], sizes = [16, 256], strides = [1, 1]} : vector<16x384xbf16> to vector<16x256xbf16>
    %16 = tpu.concatenate %13, %14, %15 in 0 : vector<16x256xbf16>, vector<16x256xbf16>, vector<16x256xbf16> -> vector<48x256xbf16>
    %c1 = arith.constant 1 : index
    %c0_8 = arith.constant 0 : index
    %c0_9 = arith.constant 0 : index
    %17 = vector.load %arg3[%c1, %c0_8, %c0_9] : memref<3x8x48xbf16, #tpu.memory_space<vmem>>, vector<1x8x48xbf16>
    %18 = vector.shape_cast %17 : vector<1x8x48xbf16> to vector<8x48xbf16>
    %cst_10 = arith.constant dense<0.000000e+00> : vector<8x256xf32>
    %19 = tpu.matmul %18, %16, %cst_10 {dimension_numbers = #tpu.dot_dimension_numbers<[1], [0], [0], [1], [0, 0, 1, 1], [], []>} : vector<8x48xbf16>, vector<48x256xbf16>, vector<8x256xf32> -> vector<8x256xf32>
    %20 = arith.addf %12, %19 : vector<8x256xf32>
    %21 = vector.extract_strided_slice %1 {offsets = [0, 2], sizes = [16, 256], strides = [1, 1]} : vector<16x384xbf16> to vector<16x256xbf16>
    %22 = vector.extract_strided_slice %1 {offsets = [0, 18], sizes = [16, 256], strides = [1, 1]} : vector<16x384xbf16> to vector<16x256xbf16>
    %23 = vector.extract_strided_slice %1 {offsets = [0, 34], sizes = [16, 256], strides = [1, 1]} : vector<16x384xbf16> to vector<16x256xbf16>
    %24 = tpu.concatenate %21, %22, %23 in 0 : vector<16x256xbf16>, vector<16x256xbf16>, vector<16x256xbf16> -> vector<48x256xbf16>
    %25 = vector.extract_strided_slice %2 {offsets = [1, 0], sizes = [1, 256], strides = [1, 1]} : vector<2x256xbf16> to vector<1x256xbf16>
    %26 = vector.broadcast %25 : vector<1x256xbf16> to vector<48x256xbf16>
    %27 = arith.mulf %24, %26 : vector<48x256xbf16>
    %c2 = arith.constant 2 : index
    %c0_11 = arith.constant 0 : index
    %c0_12 = arith.constant 0 : index
    %28 = vector.load %arg3[%c2, %c0_11, %c0_12] : memref<3x8x48xbf16, #tpu.memory_space<vmem>>, vector<1x8x48xbf16>
    %29 = vector.shape_cast %28 : vector<1x8x48xbf16> to vector<8x48xbf16>
    %cst_13 = arith.constant dense<0.000000e+00> : vector<8x256xf32>
    %30 = tpu.matmul %29, %27, %cst_13 {dimension_numbers = #tpu.dot_dimension_numbers<[1], [0], [0], [1], [0, 0, 1, 1], [], []>} : vector<8x48xbf16>, vector<48x256xbf16>, vector<8x256xf32> -> vector<8x256xf32>
    %31 = arith.addf %20, %30 : vector<8x256xf32>
    %c0_14 = arith.constant 0 : index
    %c0_15 = arith.constant 0 : index
    %32 = vector.load %arg4[%c0_14, %c0_15] : memref<8x1xf32, #tpu.memory_space<vmem>>, vector<8x1xf32>
    %33 = vector.broadcast %32 : vector<8x1xf32> to vector<8x256xf32>
    %34 = arith.addf %31, %33 : vector<8x256xf32>
    %cst_16 = arith.constant 5.000000e-01 : f32
    %35 = vector.broadcast %cst_16 : f32 to vector<8x256xf32>
    %36 = arith.mulf %35, %34 : vector<8x256xf32>
    %37 = math.tanh %36 : vector<8x256xf32>
    %cst_17 = arith.constant 5.000000e-01 : f32
    %38 = vector.broadcast %cst_17 : f32 to vector<8x256xf32>
    %39 = arith.mulf %38, %37 : vector<8x256xf32>
    %cst_18 = arith.constant 5.000000e-01 : f32
    %40 = vector.broadcast %cst_18 : f32 to vector<8x256xf32>
    %41 = arith.addf %39, %40 : vector<8x256xf32>
    %c0_19 = arith.constant 0 : index
    %c0_20 = arith.constant 0 : index
    %c0_21 = arith.constant 0 : index
    %42 = vector.load %arg6[%c0_19, %c0_20, %c0_21] : memref<1x8x256xf32, #tpu.memory_space<vmem>>, vector<1x8x256xf32>
    %43 = vector.shape_cast %42 : vector<1x8x256xf32> to vector<8x256xf32>
    %44 = vector.shape_cast %41 : vector<8x256xf32> to vector<1x8x256xf32>
    tpu.vector_store %arg6[%c0_19, %c0_20, %c0_21], %44 {strides = array<i32>} : memref<1x8x256xf32, #tpu.memory_space<vmem>>, vector<1x8x256xf32>,
    return
  }
  func.func @transform_0(%arg0: i32, %arg1: i32) -> (i32, i32, i32, i32) {
    %c0_i32 = arith.constant 0 : i32
    %c0_i32_0 = arith.constant 0 : i32
    %c0_i32_1 = arith.constant 0 : i32
    return %arg0, %arg1, %c0_i32, %c0_i32_0 : i32, i32, i32, i32
  }
  func.func @transform_1(%arg0: i32, %arg1: i32) -> (i32, i32, i32) {
    %c0_i32 = arith.constant 0 : i32
    %c0_i32_0 = arith.constant 0 : i32
    %c0_i32_1 = arith.constant 0 : i32
    %c0_i32_2 = arith.constant 0 : i32
    return %c0_i32, %c0_i32_0, %c0_i32_1 : i32, i32, i32
  }
  func.func @transform_2(%arg0: i32, %arg1: i32) -> (i32, i32) {
    %c0_i32 = arith.constant 0 : i32
    %c0_i32_0 = arith.constant 0 : i32
    %c0_i32_1 = arith.constant 0 : i32
    return %c0_i32, %c0_i32_0 : i32, i32
  }
  func.func @transform_3(%arg0: i32, %arg1: i32) -> (i32, i32) {
    %c0_i32 = arith.constant 0 : i32
    %c0_i32_0 = arith.constant 0 : i32
    %c0_i32_1 = arith.constant 0 : i32
    return %c0_i32, %c0_i32_0 : i32, i32
  }
  func.func @transform_4(%arg0: i32, %arg1: i32) -> (i32, i32, i32) {
    %c0_i32 = arith.constant 0 : i32
    %c0_i32_0 = arith.constant 0 : i32
    return %arg0, %c0_i32, %arg1 : i32, i32, i32
  }
}

</mosaic_0001>

<llo_original>
// kernel: basic_block_sig.1
$region0: #{basic_block_sig.1}
  #allocation0 [shape = 'u32[]', space=smem, size = 0x4, offset = 0x4, fixed_abs, tag = 'smem constant byte address 0x4 - core index']
  #allocation1 [shape = 'u32[144,128]{1,0:T(1,128)}', space=vmem, size = 0x12000, scoped, tag = 'internal scratch']
  %s0 = inlined_call_operand.vmem [shape: bf16[2,1,16,384], index: 0, kind: input, shape index: {}]
  %s1 = inlined_call_operand.vmem [shape: bf16[3,8,48], index: 1, kind: input, shape index: {}]
  %s2 = inlined_call_operand.vmem [shape: f32[8,1], index: 2, kind: input, shape index: {}]
  %s3 = inlined_call_operand.vmem [shape: bf16[2,256], index: 3, kind: input, shape index: {}]
  %s4 = inlined_call_operand.vmem [shape: f32[2,8,256], index: 4, kind: output, shape index: {}]
  %s5 = sld [smem:[#allocation0]]
  $region49: #{basic_block_sig.1} parent=0
    _
  %s7 = ssub.s32 1, %s5
  %s8 = scalar_select 0, %s7, %s5
  loop: start=0, step=1, limit=4
  $region2: #{basic_block_sig.1} parent=0 // loop_pre_header
    _
  $region3: #{basic_block_sig.1} parent=0 // loop_header
    %s10 = sphi 0, %s14
    %p11 = scmp.ge.s32.totalorder %s10, 4
    %s17 = sphi 0, %s29
    %s18 = sphi 0, %s25
    %s19 = sphi 0, %s17
    %s20 = sphi 0, %s18
    %s21 = sphi 0, %s19
    %s22 = sphi 0, %s20
    %s34 = sphi 0, %s36
    %s37 = sphi 0, %s34
    %s38 = sphi 0, %s37
    %s54 = sphi 0, %s38
    %s58 = sphi 0, %s58
    %s60 = sphi 0, %s58
    %s61 = sphi 0, %s60
    %s75 = sphi 0, %s61
    %s79 = sphi 0, %s79
    %s81 = sphi 0, %s79
    %s82 = sphi 0, %s81
    %s96 = sphi 0, %s82
    %s100 = sphi 0, %s100
    %s102 = sphi 0, %s100
    %s103 = sphi 0, %s102
    %s117 = sphi 0, %s103
    %s125 = sphi 0, %s127
    %s128 = sphi 0, %s125
    %s129 = sphi 0, %s128
    %s145 = sphi 0, %s129
  $region4: #{basic_block_sig.1} parent=0 // loop_header_branch
    %13 = sbr.rel (%p11) target = $region8
  $region5: #{basic_block_sig.1} parent=0 // loop_body
    %s15 = ssub.s32 %s10, 1
    %s16 = ssub.s32 %s10, 2
    %s23 = sadd.s32 1, %s18
    %p24 = scmp.ge.s32.totalorder %s23, 1
    %s25 = scalar_select %p24, 0, %s23
    %s26 = sadd.s32 1, %s17
    %s27 = scalar_select %p24, %s26, %s17
    %p28 = scmp.ge.s32.totalorder %s27, 2
    %s29 = scalar_select %p28, 0, %s27
    %s30 = ssub.s32 %s17, %s29
    %s31 = ssub.s32 %s18, %s25
    %s32 = sor.u32 %s30, %s31
    %p33 = scmp.eq.s32.totalorder %s32, 0
    %s35 = sadd.s32 %s34, 1
    %s36 = scalar_select %p33, %s34, %s35
    %p39 = pneg %p33
    %p40 = scmp.eq.s32.totalorder %s10, 1
    %p41 = por %p39, %p40
    %p42 = scmp.ne.s32.totalorder %s34, %s37
    %p43 = scmp.eq.s32.totalorder %s10, 0
    %p44 = por %p42, %p43
    %p45 = scmp.ne.s32.totalorder %s34, %s37
    %p46 = scmp.eq.s32.totalorder %s15, 1
    %p47 = por %p45, %p46
    %p48 = scmp.ne.s32.totalorder %s37, %s38
    %p49 = scmp.eq.s32.totalorder %s15, 0
    %p50 = por %p48, %p49
    %p51 = scmp.ne.s32.totalorder %s37, %s38
    %p52 = scmp.eq.s32.totalorder %s16, 1
    %p53 = por %p51, %p52
    %p55 = scmp.ne.s32.totalorder %s38, %s54
    %p56 = scmp.eq.s32.totalorder %s16, 0
    %p57 = por %p55, %p56
    %s59 = sadd.s32 %s58, 1
    %p62 = scmp.eq.s32.totalorder %s10, 1
    %p63 = scmp.ne.s32.totalorder %s58, %s60
    %p64 = scmp.eq.s32.totalorder %s10, 0
    %p65 = por %p63, %p64
    %p66 = scmp.ne.s32.totalorder %s58, %s60
    %p67 = scmp.eq.s32.totalorder %s15, 1
    %p68 = por %p66, %p67
    %p69 = scmp.ne.s32.totalorder %s60, %s61
    %p70 = scmp.eq.s32.totalorder %s15, 0
    %p71 = por %p69, %p70
    %p72 = scmp.ne.s32.totalorder %s60, %s61
    %p73 = scmp.eq.s32.totalorder %s16, 1
    %p74 = por %p72, %p73
    %p76 = scmp.ne.s32.totalorder %s61, %s75
    %p77 = scmp.eq.s32.totalorder %s16, 0
    %p78 = por %p76, %p77
    %s80 = sadd.s32 %s79, 1
    %p83 = scmp.eq.s32.totalorder %s10, 1
    %p84 = scmp.ne.s32.totalorder %s79, %s81
    %p85 = scmp.eq.s32.totalorder %s10, 0
    %p86 = por %p84, %p85
    %p87 = scmp.ne.s32.totalorder %s79, %s81
    %p88 = scmp.eq.s32.totalorder %s15, 1
    %p89 = por %p87, %p88
    %p90 = scmp.ne.s32.totalorder %s81, %s82
    %p91 = scmp.eq.s32.totalorder %s15, 0
    %p92 = por %p90, %p91
    %p93 = scmp.ne.s32.totalorder %s81, %s82
    %p94 = scmp.eq.s32.totalorder %s16, 1
    %p95 = por %p93, %p94
    %p97 = scmp.ne.s32.totalorder %s82, %s96
    %p98 = scmp.eq.s32.totalorder %s16, 0
    %p99 = por %p97, %p98
    %s101 = sadd.s32 %s100, 1
    %p104 = scmp.eq.s32.totalorder %s10, 1
    %p105 = scmp.ne.s32.totalorder %s100, %s102
    %p106 = scmp.eq.s32.totalorder %s10, 0
    %p107 = por %p105, %p106
    %p108 = scmp.ne.s32.totalorder %s100, %s102
    %p109 = scmp.eq.s32.totalorder %s15, 1
    %p110 = por %p108, %p109
    %p111 = scmp.ne.s32.totalorder %s102, %s103
    %p112 = scmp.eq.s32.totalorder %s15, 0
    %p113 = por %p111, %p112
    %p114 = scmp.ne.s32.totalorder %s102, %s103
    %p115 = scmp.eq.s32.totalorder %s16, 1
    %p116 = por %p114, %p115
    %p118 = scmp.ne.s32.totalorder %s103, %s117
    %p119 = scmp.eq.s32.totalorder %s16, 0
    %p120 = por %p118, %p119
    %s121 = ssub.s32 %s17, %s29
    %s122 = ssub.s32 %s18, %s25
    %s123 = sor.u32 %s121, %s122
    %p124 = scmp.eq.s32.totalorder %s123, 0
    %s126 = sadd.s32 %s125, 1
    %s127 = scalar_select %p124, %s125, %s126
    %p130 = pneg %p124
    %p131 = scmp.eq.s32.totalorder %s10, 1
    %p132 = por %p130, %p131
    %p133 = scmp.ne.s32.totalorder %s125, %s128
    %p134 = scmp.eq.s32.totalorder %s10, 0
    %p135 = por %p133, %p134
    %p136 = scmp.ne.s32.totalorder %s125, %s128
    %p137 = scmp.eq.s32.totalorder %s15, 1
    %p138 = por %p136, %p137
    %p139 = scmp.ne.s32.totalorder %s128, %s129
    %p140 = scmp.eq.s32.totalorder %s15, 0
    %p141 = por %p139, %p140
    %p142 = scmp.ne.s32.totalorder %s128, %s129
    %p143 = scmp.eq.s32.totalorder %s16, 1
    %p144 = por %p142, %p143
    %p146 = scmp.ne.s32.totalorder %s129, %s145
    %p147 = scmp.eq.s32.totalorder %s16, 0
    %p148 = por %p146, %p147
    %p149 = scmp.le.s32.totalorder 1, %s10
    %p150 = scmp.lt.s32.totalorder %s10, 3
    %p151 = pnand %p149, %p150
    %p152 = pneg %p151
    // Predicated region
    $region9: #{basic_block_sig.1} parent=5 // pred_check
      _
    $region10: #{basic_block_sig.1} parent=5 // pred_check_branch
      %154 = sbr.rel (%p151) target = $region12
    $region11: #{basic_block_sig.1} parent=5 // pred_region
      %s155 = ssub.s32 %s10, 1
      // Predicated region
      $region13: #{basic_block_sig.1} parent=11 // pred_check
        %p156 = pneg %p71
      $region14: #{basic_block_sig.1} parent=11 // pred_check_branch
        %158 = sbr.rel (%p156) target = $region16
      $region15: #{basic_block_sig.1} parent=11 // pred_region
        _
      $region16: #{basic_block_sig.1} parent=11 // pred_fallthru
        _
      // Predicated region
      $region17: #{basic_block_sig.1} parent=11 // pred_check
        %p159 = pneg %p92
      $region18: #{basic_block_sig.1} parent=11 // pred_check_branch
        %161 = sbr.rel (%p159) target = $region20
      $region19: #{basic_block_sig.1} parent=11 // pred_region
        _
      $region20: #{basic_block_sig.1} parent=11 // pred_fallthru
        _
      // Predicated region
      $region21: #{basic_block_sig.1} parent=11 // pred_check
        %p162 = pneg %p113
      $region22: #{basic_block_sig.1} parent=11 // pred_check_branch
        %164 = sbr.rel (%p162) target = $region24
      $region23: #{basic_block_sig.1} parent=11 // pred_region
        _
      $region24: #{basic_block_sig.1} parent=11 // pred_fallthru
        _
    $region12: #{basic_block_sig.1} parent=5 // pred_fallthru
      _
    %p165 = scmp.lt.s32.totalorder %s10, 2
    // Predicated region
    $region25: #{basic_block_sig.1} parent=5 // pred_check
      %p166 = pneg %p165
    $region26: #{basic_block_sig.1} parent=5 // pred_check_branch
      %168 = sbr.rel (%p166) target = $region28
    $region27: #{basic_block_sig.1} parent=5 // pred_region
      // Predicated region
      $region29: #{basic_block_sig.1} parent=27 // pred_check
        %p169 = pneg %p44
      $region30: #{basic_block_sig.1} parent=27 // pred_check_branch
        %171 = sbr.rel (%p169) target = $region32
      $region31: #{basic_block_sig.1} parent=27 // pred_region
        %p172 = scmp.lt.s32.totalorder %s17, 1
        %s173 = scalar_select %p172, %s17, 1
        %p174 = scmp.lt.s32.totalorder %s18, 0
        %s175 = scalar_select %p174, %s18, 0
        %s176 = smul.addr %s175, 6
        %s177 = smul.addr %s173, 6
        %s178 = sadd.s32 %s176, %s177
        %s179 = smul.addr %s178, 4
        %s180 = scalar_lea.vmem %s0, %s179
      $region32: #{basic_block_sig.1} parent=27 // pred_fallthru
        _
    $region28: #{basic_block_sig.1} parent=5 // pred_fallthru
      _
    %p181 = scmp.le.s32.totalorder 1, %s10
    %p182 = scmp.lt.s32.totalorder %s10, 3
    %p183 = pnand %p181, %p182
    %p184 = pneg %p183
    // Predicated region
    $region33: #{basic_block_sig.1} parent=5 // pred_check
      _
    $region34: #{basic_block_sig.1} parent=5 // pred_check_branch
      %186 = sbr.rel (%p183) target = $region36
    $region35: #{basic_block_sig.1} parent=5 // pred_region
      %s187 = ssub.s32 %s10, 1
      %p188 = scmp.lt.s32.totalorder %s19, 1
      %s189 = scalar_select %p188, %s19, 1
      %p190 = scmp.lt.s32.totalorder %s20, 0
      %s191 = scalar_select %p190, %s20, 0
      %s192 = smul.addr %s191, 6
      %s193 = smul.addr %s189, 6
      %s194 = sadd.s32 %s192, %s193
      %s195 = smul.addr %s194, 4
      %s196 = scalar_lea.vmem %s0, %s195
      %p197 = pneg %p50
      %p198 = pneg %p47
      %p199 = pneg %p71
      %p200 = pneg %p68
      %p201 = pneg %p92
      %p202 = pneg %p89
      %p203 = pneg %p113
      %p204 = pneg %p110
      %p205 = pneg %p141
      %p206 = pneg %p138
      %s207 = smul.u32 2, %s20
      %p208 = scmp.lt.s32.totalorder %s19, 1
      %s209 = scalar_select %p208, %s19, 1
      %p210 = scmp.lt.s32.totalorder %s207, 1
      %s211 = scalar_select %p210, %s207, 1
      %s212 = smul.addr %s209, 2
      %s213 = sadd.s32 %s211, %s212
      %s214 = smul.addr %s213, 8
      %s215 = scalar_lea.vmem %s4, %s214
      %p216 = scmp.lt.s32.totalorder %s19, 1
      %s217 = scalar_select %p216, %s19, 1
      %p218 = scmp.lt.s32.totalorder %s20, 0
      %s219 = scalar_select %p218, %s20, 0
      %s220 = smul.addr %s219, 6
      %s221 = smul.addr %s217, 6
      %s222 = sadd.s32 %s220, %s221
      %s223 = smul.addr %s222, 4
      %s224 = scalar_lea.vmem %s0, %s223
      %s225 = smul.u32 2, %s20
      %p226 = scmp.lt.s32.totalorder %s19, 1
      %s227 = scalar_select %p226, %s19, 1
      %p228 = scmp.lt.s32.totalorder %s225, 1
      %s229 = scalar_select %p228, %s225, 1
      %s230 = smul.addr %s227, 2
      %s231 = sadd.s32 %s229, %s230
      %s232 = smul.addr %s231, 8
      %s233 = scalar_lea.vmem %s4, %s232
      %s234 = smul.u32 2, %s20
      %v236 = vld [vmem:[%s224] sm:$0xff]
      %v237 = vld [vmem:[%s224 + $0x8] sm:$0xf]
      %v238 = vld [vmem:[%s224 + $0xc] sm:$0xff]
      %v239 = vld [vmem:[%s224 + $0x14] sm:$0xf]
      %v240 = vld [vmem:[%s3] sm:$0x3]
      %v243 = vunpack.c.l.b16 %v236
      %v244 = vunpack.c.h.b16 %v236
      %v245 = vunpack.c.l.b16 %v238
      %v246 = vunpack.c.h.b16 %v238
      %v247 = vpack.c.b16 %v245, %v243
      %v248 = vpack.c.b16 %v246, %v244
      %v253 = vunpack.c.l.b16 %v237
      %v254 = vunpack.c.l.b16 %v239
      %v255 = vpack.c.b16 %v254, %v253
      %256 = vrot.lane.b32.xlu0 %v247, 112
      %v257 = vpop.permute.xlu0 %256
      %258 = vrot.lane.b32.xlu0 %v248, 112
      %v259 = vpop.permute.xlu0 %258
      %260 = vrot.lane.b32.xlu0 %v255, 112
      %v261 = vpop.permute.xlu0 %260
      %vm262 = vcmask 916480
      %v263 = vsel %vm262, %v257, %v259
      %v264 = vsel %vm262, %v259, %v261
      %267 = vrot.lane.b32.xlu0 %v247, 96
      %v268 = vpop.permute.xlu0 %267
      %269 = vrot.lane.b32.xlu0 %v248, 96
      %v270 = vpop.permute.xlu0 %269
      %271 = vrot.lane.b32.xlu0 %v255, 96
      %v272 = vpop.permute.xlu0 %271
      %vm273 = vcmask 785408
      %v274 = vsel %vm273, %v268, %v270
      %v275 = vsel %vm273, %v270, %v272
      %v280 = vunpack.c.l.s4 1966171168
      %v281 = vunpack.c.0.s8 %v280
      %v282 = vlaneseq
      %v283 = vshrl.u32 %v282, 7
      %v284 = vsub.s32 %v281, %v283
      %v285 = vrot.slane %v240, %v284
      %v286 = vcombine.high %v285, %v285
      %v288 = vunpack.c.l.s4 1966171168
      %v289 = vunpack.c.0.s8 %v288
      %v290 = vlaneseq
      %v291 = vshrl.u32 %v290, 7
      %v292 = vsub.s32 %v289, %v291
      %v293 = vrot.slane %v285, %v292
      %v295 = vunpack.c.l.s4 1966171168
      %v296 = vunpack.c.0.s8 %v295
      %v297 = vlaneseq
      %v298 = vshrl.u32 %v297, 7
      %v299 = vsub.s32 %v296, %v298
      %v300 = vrot.slane %v286, %v299
      %v302 = vpack.i.b16 %v293, %v293
      %v304 = vlaneseq
      %v305 = vshrl.u32 %v304, 7
      %v306 = vsub.s32 0, %v305
      %v307 = vrot.slane %v302, %v306
      %v309 = vpack.i.b16 %v300, %v300
      %v311 = vlaneseq
      %v312 = vshrl.u32 %v311, 7
      %v313 = vsub.s32 0, %v312
      %v314 = vrot.slane %v309, %v313
      %v315 = vmul.bf16 %v247, %v307
      %v316 = vmul.bf16 %v248, %v314
      %v317 = vmul.bf16 %v263, %v307
      %v318 = vmul.bf16 %v264, %v314
      %v319 = vmul.bf16 %v274, %v307
      %v320 = vmul.bf16 %v275, %v314
      %v321 = vld [vmem:[%s1] sm:$0xf]
      %s322 = scalar_lea.vmem %s1, 4
      %v323 = vld [vmem:[%s322] sm:$0xf]
      %324 = vrot.lane.b32.xlu0 %v247, 127
      %v325 = vpop.permute.xlu0 %324
      %326 = vrot.lane.b32.xlu0 %v248, 127
      %v327 = vpop.permute.xlu0 %326
      %328 = vrot.lane.b32.xlu0 %v255, 127
      %v329 = vpop.permute.xlu0 %328
      %330 = vrot.lane.b32.xlu0 %v263, 127
      %v331 = vpop.permute.xlu0 %330
      %332 = vrot.lane.b32.xlu0 %v264, 127
      %v333 = vpop.permute.xlu0 %332
      %334 = vrot.lane.b32.xlu0 %v261, 127
      %v335 = vpop.permute.xlu0 %334
      %336 = vrot.lane.b32.xlu0 %v274, 127
      %v337 = vpop.permute.xlu0 %336
      %338 = vrot.lane.b32.xlu0 %v275, 127
      %v339 = vpop.permute.xlu0 %338
      %340 = vrot.lane.b32.xlu0 %v272, 127
      %v341 = vpop.permute.xlu0 %340
      %vm342 = vcmask 1039360
      %v343 = vsel %vm342, %v325, %v327
      %v344 = vsel %vm342, %v327, %v329
      %v345 = vsel %vm342, %v331, %v333
      %v346 = vsel %vm342, %v333, %v335
      %v347 = vsel %vm342, %v337, %v339
      %v348 = vsel %vm342, %v339, %v341
      %vm355 = vcmask 392192
      %v357 = vsel %vm355, %v323, 0
      %359 = vmatprep.subr.bf16.mxu0 %v344
      %360 = vmatpush1.bf16.msra.mxu0 %v343
      %361 = vmatprep.subr.bf16.mxu0 %v346
      %362 = vmatpush1.bf16.msra.mxu0 %v345
      %363 = vmatprep.subr.bf16.mxu0 %v348
      %364 = vmatpush1.bf16.msra.mxu0 %v347
      %365 = vmatprep.subr.bf16.mxu0 0
      %366 = vmatpush1.bf16.msra.mxu0 0
      %367 = vmatprep.subr.bf16.mxu0 0
      %368 = vmatpush1.bf16.msra.mxu0 0
      %369 = vmatprep.subr.bf16.mxu0 0
      %370 = vmatpush1.bf16.msra.mxu0 0
      %371 = vmatprep.subr.bf16.mxu0 0
      %372 = vmatpush1.bf16.msra.mxu0 0
      %373 = vmatprep.subr.bf16.mxu0 0
      %374 = vmatpush1.bf16.msra.mxu0 0
      %375 = vmatprep.subr.bf16.mxu0 0
      %376 = vmatpush1.bf16.msra.mxu0 0
      %377 = vmatprep.subr.bf16.mxu0 0
      %378 = vmatpush1.bf16.msra.mxu0 0
      %379 = vmatprep.subr.bf16.mxu0 0
      %380 = vmatpush1.bf16.msra.mxu0 0
      %381 = vmatprep.subr.bf16.mxu0 0
      %382 = vmatpush1.bf16.msra.mxu0 0
      %383 = vmatprep.subr.bf16.mxu0 0
      %384 = vmatpush1.bf16.msra.mxu0 0
      %385 = vmatprep.subr.bf16.mxu0 0
      %386 = vmatpush1.bf16.msra.mxu0 0
      %387 = vmatprep.subr.bf16.mxu0 0
      %388 = vmatpush1.bf16.msra.mxu0 0
      %389 = vmatprep.subr.bf16.mxu0 0
      %390 = vmatpush1.bf16.msra.mxu0 0
      %391 = vmatprep.mubr.bf16.mxu0 0
      %392 = vmatmul.mubr.bf16.gmra.mrb[0].mxu0 %v357
      %v393 = vpop.f32.mrb[0].mxu0
      %v394 = vadd.f32 0.0, %v393
      %v395 = vpop.f32.mrb[0].mxu0
      %v396 = vadd.f32 0.0, %v395
      %v397 = vpop.f32.mrb[0].mxu0
      %v398 = vpop.f32.mrb[0].mxu0
      %399 = vdwg.mxu0
      %v401 = vsel %vm355, %v321, 0
      %403 = vmatprep.subr.bf16.mxu0 %v316
      %404 = vmatpush1.bf16.msra.mxu0 %v315
      %405 = vmatprep.subr.bf16.mxu0 %v318
      %406 = vmatpush1.bf16.msra.mxu0 %v317
      %407 = vmatprep.subr.bf16.mxu0 %v320
      %408 = vmatpush1.bf16.msra.mxu0 %v319
      %409 = vmatprep.subr.bf16.mxu0 0
      %410 = vmatpush1.bf16.msra.mxu0 0
      %411 = vmatprep.subr.bf16.mxu0 0
      %412 = vmatpush1.bf16.msra.mxu0 0
      %413 = vmatprep.subr.bf16.mxu0 0
      %414 = vmatpush1.bf16.msra.mxu0 0
      %415 = vmatprep.subr.bf16.mxu0 0
      %416 = vmatpush1.bf16.msra.mxu0 0
      %417 = vmatprep.subr.bf16.mxu0 0
      %418 = vmatpush1.bf16.msra.mxu0 0
      %419 = vmatprep.subr.bf16.mxu0 0
      %420 = vmatpush1.bf16.msra.mxu0 0
      %421 = vmatprep.subr.bf16.mxu0 0
      %422 = vmatpush1.bf16.msra.mxu0 0
      %423 = vmatprep.subr.bf16.mxu0 0
      %424 = vmatpush1.bf16.msra.mxu0 0
      %425 = vmatprep.subr.bf16.mxu0 0
      %426 = vmatpush1.bf16.msra.mxu0 0
      %427 = vmatprep.subr.bf16.mxu0 0
      %428 = vmatpush1.bf16.msra.mxu0 0
      %429 = vmatprep.subr.bf16.mxu0 0
      %430 = vmatpush1.bf16.msra.mxu0 0
      %431 = vmatprep.subr.bf16.mxu0 0
      %432 = vmatpush1.bf16.msra.mxu0 0
      %433 = vmatprep.subr.bf16.mxu0 0
      %434 = vmatpush1.bf16.msra.mxu0 0
      %435 = vmatprep.mubr.bf16.mxu0 0
      %436 = vmatmul.mubr.bf16.gmra.mrb[0].mxu0 %v401
      %v437 = vpop.f32.mrb[0].mxu0
      %v438 = vadd.f32 %v394, %v437
      %v439 = vpop.f32.mrb[0].mxu0
      %v440 = vadd.f32 %v396, %v439
      %v441 = vpop.f32.mrb[0].mxu0
      %v442 = vpop.f32.mrb[0].mxu0
      %443 = vdwg.mxu0
      %v447 = vshrl.u32 %v293, 16
      %v448 = vpack.i.b16 %v447, %v447
      %v450 = vlaneseq
      %v451 = vshrl.u32 %v450, 7
      %v452 = vsub.s32 0, %v451
      %v453 = vrot.slane %v448, %v452
      %v454 = vshrl.u32 %v300, 16
      %v455 = vpack.i.b16 %v454, %v454
      %v457 = vlaneseq
      %v458 = vshrl.u32 %v457, 7
      %v459 = vsub.s32 0, %v458
      %v460 = vrot.slane %v455, %v459
      %463 = vrot.lane.b32.xlu0 %v453, 2
      %v464 = vpop.permute.xlu0 %463
      %465 = vrot.lane.b32.xlu0 %v460, 2
      %v466 = vpop.permute.xlu0 %465
      %vm467 = vcmask 15360
      %v468 = vsel %vm467, %v464, %v466
      %v472 = vmul.bf16 %v247, %v464
      %v473 = vmul.bf16 %v248, %v468
      %v474 = vmul.bf16 %v255, %v466
      %v475 = vmul.bf16 %v263, %v464
      %v476 = vmul.bf16 %v264, %v468
      %v477 = vmul.bf16 %v261, %v466
      %v478 = vmul.bf16 %v274, %v464
      %v479 = vmul.bf16 %v275, %v468
      %v480 = vmul.bf16 %v272, %v466
      %s481 = scalar_lea.vmem %s1, 8
      %v482 = vld [vmem:[%s481] sm:$0xf]
      %492 = vrot.lane.b32.xlu0 %v472, 126
      %v493 = vpop.permute.xlu0 %492
      %494 = vrot.lane.b32.xlu0 %v473, 126
      %v495 = vpop.permute.xlu0 %494
      %496 = vrot.lane.b32.xlu0 %v474, 126
      %v497 = vpop.permute.xlu0 %496
      %498 = vrot.lane.b32.xlu0 %v475, 126
      %v499 = vpop.permute.xlu0 %498
      %500 = vrot.lane.b32.xlu0 %v476, 126
      %v501 = vpop.permute.xlu0 %500
      %502 = vrot.lane.b32.xlu0 %v477, 126
      %v503 = vpop.permute.xlu0 %502
      %504 = vrot.lane.b32.xlu0 %v478, 126
      %v505 = vpop.permute.xlu0 %504
      %506 = vrot.lane.b32.xlu0 %v479, 126
      %v507 = vpop.permute.xlu0 %506
      %508 = vrot.lane.b32.xlu0 %v480, 126
      %v509 = vpop.permute.xlu0 %508
      %vm510 = vcmask 1031168
      %v511 = vsel %vm510, %v493, %v495
      %v512 = vsel %vm510, %v495, %v497
      %v513 = vsel %vm510, %v499, %v501
      %v514 = vsel %vm510, %v501, %v503
      %v515 = vsel %vm510, %v505, %v507
      %v516 = vsel %vm510, %v507, %v509
      %v524 = vsel %vm355, %v482, 0
      %526 = vmatprep.subr.bf16.mxu0 %v512
      %527 = vmatpush1.bf16.msra.mxu0 %v511
      %528 = vmatprep.subr.bf16.mxu0 %v514
      %529 = vmatpush1.bf16.msra.mxu0 %v513
      %530 = vmatprep.subr.bf16.mxu0 %v516
      %531 = vmatpush1.bf16.msra.mxu0 %v515
      %532 = vmatprep.subr.bf16.mxu0 0
      %533 = vmatpush1.bf16.msra.mxu0 0
      %534 = vmatprep.subr.bf16.mxu0 0
      %535 = vmatpush1.bf16.msra.mxu0 0
      %536 = vmatprep.subr.bf16.mxu0 0
      %537 = vmatpush1.bf16.msra.mxu0 0
      %538 = vmatprep.subr.bf16.mxu0 0
      %539 = vmatpush1.bf16.msra.mxu0 0
      %540 = vmatprep.subr.bf16.mxu0 0
      %541 = vmatpush1.bf16.msra.mxu0 0
      %542 = vmatprep.subr.bf16.mxu0 0
      %543 = vmatpush1.bf16.msra.mxu0 0
      %544 = vmatprep.subr.bf16.mxu0 0
      %545 = vmatpush1.bf16.msra.mxu0 0
      %546 = vmatprep.subr.bf16.mxu0 0
      %547 = vmatpush1.bf16.msra.mxu0 0
      %548 = vmatprep.subr.bf16.mxu0 0
      %549 = vmatpush1.bf16.msra.mxu0 0
      %550 = vmatprep.subr.bf16.mxu0 0
      %551 = vmatpush1.bf16.msra.mxu0 0
      %552 = vmatprep.subr.bf16.mxu0 0
      %553 = vmatpush1.bf16.msra.mxu0 0
      %554 = vmatprep.subr.bf16.mxu0 0
      %555 = vmatpush1.bf16.msra.mxu0 0
      %556 = vmatprep.subr.bf16.mxu0 0
      %557 = vmatpush1.bf16.msra.mxu0 0
      %558 = vmatprep.mubr.bf16.mxu0 0
      %559 = vmatmul.mubr.bf16.gmra.mrb[0].mxu0 %v524
      %v560 = vpop.f32.mrb[0].mxu0
      %v561 = vadd.f32 0.0, %v560
      %v562 = vpop.f32.mrb[0].mxu0
      %v563 = vadd.f32 0.0, %v562
      %v564 = vpop.f32.mrb[0].mxu0
      %v565 = vpop.f32.mrb[0].mxu0
      %566 = vdwg.mxu0
      %v567 = vadd.f32 %v438, %v561
      %v568 = vadd.f32 %v440, %v563
      %v569 = vld [vmem:[%s2] sm:$0xff]
      %571 = vset.pattern.permute.xlu0 0
      %572 = vperm.xlu0 %571, %v569
      %v573 = vpop.permute.xlu0 %572
      %v575 = vadd.f32 %v567, %v573
      %v576 = vadd.f32 %v568, %v573
      %v577 = vmul.f32 %v575, 0.5
      %v578 = vmul.f32 %v576, 0.5
      %v579 = vtanh.pop %v577
      %v580 = vtanh.pop %v578
      %v581 = vmul.f32 %v579, 0.5
      %v582 = vmul.f32 %v580, 0.5
      %v583 = vadd.f32 %v581, 0.5
      %v584 = vadd.f32 %v582, 0.5
      %585 = vst [vmem:[%s233] sm:$0xff] %v583
      %586 = vst [vmem:[%s233 + $0x8] sm:$0xff] %v584
      %s587 = smul.u32 2, %s20
      %p588 = scmp.lt.s32.totalorder %s19, 1
      %s589 = scalar_select %p588, %s19, 1
      %p590 = scmp.lt.s32.totalorder %s587, 1
      %s591 = scalar_select %p590, %s587, 1
      %s592 = smul.addr %s589, 2
      %s593 = sadd.s32 %s591, %s592
      %s594 = smul.addr %s593, 8
      %s595 = scalar_lea.vmem %s4, %s594
      // Predicated region
      $region37: #{basic_block_sig.1} parent=35 // pred_check
        %p596 = pneg %p138
      $region38: #{basic_block_sig.1} parent=35 // pred_check_branch
        %598 = sbr.rel (%p596) target = $region40
      $region39: #{basic_block_sig.1} parent=35 // pred_region
        %s599 = smul.u32 2, %s20
      $region40: #{basic_block_sig.1} parent=35 // pred_fallthru
        _
    $region36: #{basic_block_sig.1} parent=5 // pred_fallthru
      _
    %p600 = scmp.le.s32.totalorder 2, %s10
    // Predicated region
    $region41: #{basic_block_sig.1} parent=5 // pred_check
      %p601 = pneg %p600
    $region42: #{basic_block_sig.1} parent=5 // pred_check_branch
      %603 = sbr.rel (%p601) target = $region44
    $region43: #{basic_block_sig.1} parent=5 // pred_region
      %s604 = ssub.s32 %s10, 2
      // Predicated region
      $region45: #{basic_block_sig.1} parent=43 // pred_check
        %p605 = pneg %p144
      $region46: #{basic_block_sig.1} parent=43 // pred_check_branch
        %607 = sbr.rel (%p605) target = $region48
      $region47: #{basic_block_sig.1} parent=43 // pred_region
        %s608 = smul.u32 2, %s22
        %p609 = scmp.lt.s32.totalorder %s21, 1
        %s610 = scalar_select %p609, %s21, 1
        %p611 = scmp.lt.s32.totalorder %s608, 1
        %s612 = scalar_select %p611, %s608, 1
        %s613 = smul.addr %s610, 2
        %s614 = sadd.s32 %s612, %s613
        %s615 = smul.addr %s614, 8
        %s616 = scalar_lea.vmem %s4, %s615
      $region48: #{basic_block_sig.1} parent=43 // pred_fallthru
        _
    $region44: #{basic_block_sig.1} parent=5 // pred_fallthru
      _
  $region6: #{basic_block_sig.1} parent=0 // loop_footer
    %s14 = sadd.s32 1, %s10
  $region7: #{basic_block_sig.1} parent=0 // loop_footer_branch
    %9 = sbr.rel target = $region3
  $region8: #{basic_block_sig.1} parent=0 // loop_exit
    _

</llo_original>
